<compile_context>
chip_gen: v5e
topology: v5e:2x2
jax: 0.10.0
libtpu: 0.0.40
codegen_flags: <defaults>
</compile_context>

<pallas_src>
import functools

import jax
import jax.numpy as jnp
from jax.experimental import pallas as pl
from jax.experimental.pallas import tpu as pltpu


_LANE = 128   # lane width: feature/hidden/class dims padded to this


def _round_up(x, m):
    return ((x + m - 1) // m) * m


def _pad2(a, rows, cols):
    out = jnp.zeros((rows, cols), a.dtype)
    return out.at[: a.shape[0], : a.shape[1]].set(a)


# ----------------------------------------------------------------------------
# Fused Pallas kernel: all GCNConv layers + mean-pool + MLP head in one call.
# ----------------------------------------------------------------------------
def _fused_gcn_kernel(adj_resident, f_pad, h_pad, tm,
                      adj_ref, x_ref, w_ref, b_ref, pool_ref,
                      w1_ref, b1_ref, w2_ref, b2_ref,
                      out_ref, xw_ref, h_ref):
    l = pl.program_id(0)            # layer index (outer, sequential)
    i = pl.program_id(1)            # node-row tile  (inner, sequential)
    n_layers = pl.num_programs(0)
    n_tiles = pl.num_programs(1)

    # --- once per layer: feature transform XW for ALL nodes, stored as bf16 ---
    # Two pl.when branches on the scalar layer index (instead of jnp.where):
    # loads only ONE full-width operand and never reads uninitialized H at l==0.
    @pl.when((i == 0) & (l == 0))
    def _():
        xw_ref[...] = jnp.dot(
            x_ref[...], w_ref[:f_pad, :],
            preferred_element_type=jnp.float32).astype(jnp.bfloat16)

    @pl.when((i == 0) & (l > 0))
    def _():
        xw_ref[...] = jnp.dot(
            h_ref[...], w_ref[:h_pad, :],
            preferred_element_type=jnp.float32).astype(jnp.bfloat16)

    # --- every (layer, row tile): aggregate + bias + ReLU ---------------------
    row0 = pl.multiple_of(i * tm, tm)
    if adj_resident:
        adj_panel = adj_ref[pl.ds(row0, tm), :]     # full adj resident in VMEM
    else:
        adj_panel = adj_ref[...]                    # streamed (tm, n_pad) panel
    agg = jnp.dot(adj_panel, xw_ref[...], preferred_element_type=jnp.float32)
    # NOTE: padded node rows end up with h = relu(bias) != 0; this is harmless
    # because the corresponding adjacency COLUMNS and pool columns are zero, so
    # padded rows never leak into real nodes or the pooled graph embedding.
    h_tile = jnp.maximum(agg + b_ref[...], 0.0)
    h_ref[pl.ds(row0, tm), :] = h_tile.astype(jnp.bfloat16)

    # --- after the last tile of the last layer: fused pooling + MLP head ------
    @pl.when((l == n_layers - 1) & (i == n_tiles - 1))
    def _():
        pooled = jnp.dot(pool_ref[...], h_ref[...],
                         preferred_element_type=jnp.float32)
        z = jnp.dot(pooled.astype(jnp.bfloat16), w1_ref[...],
                    preferred_element_type=jnp.float32)
        z = jnp.maximum(z + b1_ref[...], 0.0)
        # dropout: training=False in forward-only evaluation -> identity
        out_ref[...] = jnp.dot(z.astype(jnp.bfloat16), w2_ref[...],
                               preferred_element_type=jnp.float32) + b2_ref[...]


# ----------------------------------------------------------------------------
# Glue (plain JAX): dense normalized adjacency, pooling matrix, params
# ----------------------------------------------------------------------------
def normalized_adjacency(edge_index, num_nodes):
    """PyG gcn_norm as a dense (N, N) matrix, rows indexed by destination."""
    src, dst = edge_index[0], edge_index[1]
    a = jnp.zeros((num_nodes, num_nodes), jnp.float32)
    a = a.at[dst, src].add(1.0)                          # duplicate edges accumulate
    diag = jnp.diagonal(a)
    a = a + jnp.diag(jnp.where(diag == 0.0, 1.0, 0.0))   # add_remaining_self_loops
    deg = a.sum(axis=1)                                  # dst-side degree incl. loop
    dinv = jnp.where(deg > 0, jax.lax.rsqrt(deg), 0.0)
    return dinv[:, None] * a * dinv[None, :]


def mean_pool_matrix(batch, num_graphs):
    """(G, N) matrix P with P @ X == global_mean_pool(X, batch)."""
    one_hot = (batch[None, :] == jnp.arange(num_graphs)[:, None]).astype(jnp.float32)
    counts = one_hot.sum(axis=1, keepdims=True)
    return one_hot / jnp.maximum(counts, 1.0)


def init_params(key, num_features, num_classes, num_layers, hidden_dim):
    """Deterministic synthetic parameters mirroring the module's shapes."""
    params = {"convs": []}
    dims = [num_features] + [hidden_dim] * num_layers
    for i in range(num_layers):
        key, kw = jax.random.split(key)
        fan_in, fan_out = dims[i], dims[i + 1]
        scale = jnp.sqrt(6.0 / (fan_in + fan_out))
        w = jax.random.uniform(kw, (fan_in, fan_out), jnp.float32, -scale, scale)
        b = jnp.zeros((fan_out,), jnp.float32)
        params["convs"].append((w, b))
    key, k1, k2, k3, k4 = jax.random.split(key, 5)
    s1 = 1.0 / jnp.sqrt(hidden_dim)
    params["lin1"] = (
        jax.random.uniform(k1, (hidden_dim, hidden_dim), jnp.float32, -s1, s1),
        jax.random.uniform(k2, (hidden_dim,), jnp.float32, -s1, s1),
    )
    params["lin2"] = (
        jax.random.uniform(k3, (hidden_dim, num_classes), jnp.float32, -s1, s1),
        jax.random.uniform(k4, (num_classes,), jnp.float32, -s1, s1),
    )
    return params


def _vmem_capacity_bytes():
    """Per-generation VMEM capacity (v5e/v6e 128 MiB, v7x 64 MiB)."""
    try:
        return int(pltpu.get_tpu_info().vmem_capacity_bytes)
    except Exception:
        return 64 << 20     # conservative (v7x-sized) fallback


# ----------------------------------------------------------------------------
# Forward pass
# ----------------------------------------------------------------------------
@functools.partial(jax.jit, static_argnames=("num_graphs",))
def gcn_forward(params, x, edge_index, batch, num_graphs):
    n, f = x.shape
    convs = params["convs"]
    num_layers = len(convs)
    hidden = convs[0][0].shape[1]
    num_classes = params["lin2"][0].shape[1]

    # Decoupled padding: x is f_pad wide, hidden/XW/H scratch only h_pad wide.
    f_pad = _round_up(f, _LANE)
    h_pad = _round_up(hidden, _LANE)
    w_pad = max(f_pad, h_pad)            # weight-stack row pad (W0 is f x hidden)
    c_pad = _round_up(num_classes, _LANE)
    g_pad = _round_up(num_graphs, 8)

    vmem_cap = _vmem_capacity_bytes()
    bf, f32 = 2, 4

    def budget(n_pad, tm, adj_resident, adj_bufs):
        adj = n_pad * n_pad * bf if adj_resident else adj_bufs * tm * n_pad * bf
        resident = (n_pad * f_pad * bf                                  # x
                    + 2 * (w_pad * h_pad * bf + h_pad * f32)            # layer W/b x2
                    + g_pad * n_pad * bf                                # pool
                    + (h_pad * h_pad + h_pad * c_pad) * bf              # head W
                    + (h_pad + c_pad) * f32                             # head b
                    + g_pad * c_pad * f32)                              # out block
        scratch = 2 * n_pad * h_pad * bf                                # XW + H bf16
        internal = tm * n_pad * bf + 2 * tm * h_pad * f32               # temporaries
        return adj + resident + scratch + internal

    # Node-row tile: 256 fills the 256x256 MXU (v6e/v7x) and halves per-step
    # overhead; keep 128 for small graphs or when VMEM is tight (v7x, v5e).
    tm = 128
    if _round_up(n, 128) >= 256:
        if budget(_round_up(n, 256), 256, False, 3) <= int(0.5 * vmem_cap):
            tm = 256
    n_pad = _round_up(n, tm)
    n_tiles = n_pad // tm

    # Adjacency residency: avoids re-streaming the N^2 bf16 matrix from HBM on
    # every layer (the dominant HBM stream) whenever it fits the VMEM budget.
    adj_resident = budget(n_pad, tm, True, 0) <= int(0.6 * vmem_cap)
    adj_bufs = 3
    vmem_need = budget(n_pad, tm, adj_resident, adj_bufs)
    vmem_limit = min(max(int(vmem_need * 1.5) + (8 << 20), 32 << 20),
                     int(0.9 * vmem_cap))

    # bf16 everywhere on the MXU inputs (half HBM/VMEM bytes, 2x MXU rate);
    # biases and all accumulation stay f32.
    adj = _pad2(normalized_adjacency(edge_index, n), n_pad, n_pad).astype(jnp.bfloat16)
    pool = _pad2(mean_pool_matrix(batch, num_graphs), g_pad, n_pad).astype(jnp.bfloat16)
    x_p = _pad2(x.astype(jnp.float32), n_pad, f_pad).astype(jnp.bfloat16)
    w_stack = jnp.stack(
        [_pad2(w, w_pad, h_pad) for (w, _) in convs]).astype(jnp.bfloat16)
    b_stack = jnp.stack([_pad2(b.reshape(1, -1), 1, h_pad) for (_, b) in convs])
    w1, b1 = params["lin1"]
    w2, b2 = params["lin2"]
    w1_p = _pad2(w1, h_pad, h_pad).astype(jnp.bfloat16)
    b1_p = _pad2(b1.reshape(1, -1), 1, h_pad)
    w2_p = _pad2(w2, h_pad, c_pad).astype(jnp.bfloat16)
    b2_p = _pad2(b2.reshape(1, -1), 1, c_pad)

    if adj_resident:
        adj_spec = pl.BlockSpec((n_pad, n_pad), lambda l, i: (0, 0))
    else:
        adj_spec = pl.BlockSpec((tm, n_pad), lambda l, i: (i, 0),
                                pipeline_mode=pl.Buffered(adj_bufs))

    # Advisory cost estimate so XLA schedules around the fused custom call.
    flops = 0
    for li in range(num_layers):
        in_dim = f_pad if li == 0 else h_pad
        flops += 2 * n_pad * in_dim * h_pad          # XW
        flops += 2 * n_pad * n_pad * h_pad           # A @ XW
    flops += (2 * g_pad * n_pad * h_pad              # pooling
              + 2 * g_pad * h_pad * h_pad            # lin1
              + 2 * g_pad * h_pad * c_pad)           # lin2
    adj_hbm = n_pad * n_pad * bf * (1 if adj_resident else num_layers)
    bytes_accessed = (adj_hbm + n_pad * f_pad * bf + g_pad * n_pad * bf
                      + num_layers * (w_pad * h_pad * bf + h_pad * f32)
                      + (h_pad * h_pad + h_pad * c_pad) * bf
                      + g_pad * c_pad * f32)
    cost = pl.CostEstimate(flops=flops, transcendentals=0,
                           bytes_accessed=bytes_accessed)

    kernel = functools.partial(_fused_gcn_kernel, adj_resident, f_pad, h_pad, tm)

    out_padded = pl.pallas_call(
        kernel,
        out_shape=jax.ShapeDtypeStruct((g_pad, c_pad), jnp.float32),
        grid=(num_layers, n_tiles),
        in_specs=[
            adj_spec,                                                    # adj (bf16)
            pl.BlockSpec((n_pad, f_pad), lambda l, i: (0, 0)),           # x (bf16)
            pl.BlockSpec((None, w_pad, h_pad), lambda l, i: (l, 0, 0)),  # layer W (bf16)
            pl.BlockSpec((None, 1, h_pad), lambda l, i: (l, 0, 0)),      # layer b (f32)
            pl.BlockSpec((g_pad, n_pad), lambda l, i: (0, 0)),           # pool (bf16)
            pl.BlockSpec((h_pad, h_pad), lambda l, i: (0, 0)),           # lin1 W (bf16)
            pl.BlockSpec((1, h_pad), lambda l, i: (0, 0)),               # lin1 b (f32)
            pl.BlockSpec((h_pad, c_pad), lambda l, i: (0, 0)),           # lin2 W (bf16)
            pl.BlockSpec((1, c_pad), lambda l, i: (0, 0)),               # lin2 b (f32)
        ],
        out_specs=pl.BlockSpec((g_pad, c_pad), lambda l, i: (0, 0)),
        scratch_shapes=[
            pltpu.VMEM((n_pad, h_pad), jnp.bfloat16),   # XW of current layer (bf16)
            pltpu.VMEM((n_pad, h_pad), jnp.bfloat16),   # H activations (bf16)
        ],
        compiler_params=pltpu.CompilerParams(
            # Layer l+1 and the fused head read the H scratch written by every
            # row tile of layer l -> sequential execution on both grid axes.
            dimension_semantics=("arbitrary", "arbitrary"),
            vmem_limit_bytes=vmem_limit,
        ),
        cost_estimate=cost,
    )(adj, x_p, w_stack, b_stack, pool, w1_p, b1_p, w2_p, b2_p)

    return out_padded[:num_graphs, :num_classes]


def gcn_reference(params, x, edge_index, batch, num_graphs):
    """Pure-JAX f32 reference of the same dense formulation (sanity check)."""
    adj = normalized_adjacency(edge_index, x.shape[0])
    pool = mean_pool_matrix(batch, num_graphs)
    h = x.astype(jnp.float32)
    for (w, b) in params["convs"]:
        h = jnp.maximum(adj @ (h @ w) + b, 0.0)
    w1, b1 = params["lin1"]
    w2, b2 = params["lin2"]
    z = jnp.maximum((pool @ h) @ w1 + b1, 0.0)
    return z @ w2 + b2


# ----------------------------------------------------------------------------
# Demo
# ----------------------------------------------------------------------------
if __name__ == "__main__":
    NUM_FEATURES = 8
    NUM_CLASSES = 4
    NUM_LAYERS = 3
    HIDDEN_DIM = 32
    NUM_NODES = 16          # two graphs of 8 nodes each
    NUM_GRAPHS = 2

    key = jax.random.PRNGKey(0)
    key, kx = jax.random.split(key)
    x = jax.random.normal(kx, (NUM_NODES, NUM_FEATURES), jnp.float32)

    # Deterministic edge_index: bidirectional ring inside each graph.
    src, dst = [], []
    for g in range(NUM_GRAPHS):
        base = g * 8
        for i in range(8):
            a, b_ = base + i, base + (i + 1) % 8
            src += [a, b_]
            dst += [b_, a]
    edge_index = jnp.array([src, dst], dtype=jnp.int32)
    batch = jnp.array([0] * 8 + [1] * 8, dtype=jnp.int32)

    params = init_params(jax.random.PRNGKey(42),
                         NUM_FEATURES, NUM_CLASSES, NUM_LAYERS, HIDDEN_DIM)

    out = gcn_forward(params, x, edge_index, batch, NUM_GRAPHS)
    out = jax.block_until_ready(out)
    assert out.shape == (NUM_GRAPHS, NUM_CLASSES)
    assert bool(jnp.all(jnp.isfinite(out)))

    ref = gcn_reference(params, x, edge_index, batch, NUM_GRAPHS)
    max_err = float(jnp.max(jnp.abs(out - ref)))
    assert max_err < 5e-2, f"max abs error vs f32 reference too large: {max_err}"

    print("KERNEL_OK")
</pallas_src>

<mosaic_0001>
module attributes {stable_mosaic.version = 11 : i64} {
  func.func @_fused_gcn_kernel(%arg0: i32, %arg1: i32, %arg2: memref<128x128xbf16, #tpu.memory_space<vmem>>, %arg3: memref<128x128xbf16, #tpu.memory_space<vmem>>, %arg4: memref<1x128x128xbf16, #tpu.memory_space<vmem>>, %arg5: memref<1x1x128xf32, #tpu.memory_space<vmem>>, %arg6: memref<8x128xbf16, #tpu.memory_space<vmem>>, %arg7: memref<128x128xbf16, #tpu.memory_space<vmem>>, %arg8: memref<1x128xf32, #tpu.memory_space<vmem>>, %arg9: memref<128x128xbf16, #tpu.memory_space<vmem>>, %arg10: memref<1x128xf32, #tpu.memory_space<vmem>>, %arg11: memref<8x128xf32, #tpu.memory_space<vmem>>, %arg12: memref<128x128xbf16, #tpu.memory_space<vmem>>, %arg13: memref<128x128xbf16, #tpu.memory_space<vmem>>) attributes {dimension_semantics = [#tpu.dimension_semantics<arbitrary>, #tpu.dimension_semantics<arbitrary>], iteration_bounds = array<i64: 3, 1>, scalar_prefetch = 0 : i64, scratch_operands = 2 : i64, tpu.core_type = #tpu.core_type<tc>, window_params = [{pipeline_mode = #tpu.pipeline_mode<synchronous>, transform_indices = @transform_0, window_bounds = array<i64: 128, 128>}, {pipeline_mode = #tpu.pipeline_mode<synchronous>, transform_indices = @transform_1, window_bounds = array<i64: 128, 128>}, {transform_indices = @transform_2, window_bounds = array<i64: 1, 128, 128>}, {transform_indices = @transform_3, window_bounds = array<i64: 1, 1, 128>}, {pipeline_mode = #tpu.pipeline_mode<synchronous>, transform_indices = @transform_4, window_bounds = array<i64: 8, 128>}, {pipeline_mode = #tpu.pipeline_mode<synchronous>, transform_indices = @transform_5, window_bounds = array<i64: 128, 128>}, {pipeline_mode = #tpu.pipeline_mode<synchronous>, transform_indices = @transform_6, window_bounds = array<i64: 1, 128>}, {pipeline_mode = #tpu.pipeline_mode<synchronous>, transform_indices = @transform_7, window_bounds = array<i64: 128, 128>}, {pipeline_mode = #tpu.pipeline_mode<synchronous>, transform_indices = @transform_8, window_bounds = array<i64: 1, 128>}, {pipeline_mode = #tpu.pipeline_mode<synchronous>, transform_indices = @transform_9, window_bounds = array<i64: 8, 128>}]} {
    %c0_i32 = arith.constant 0 : i32
    %0 = arith.cmpi eq, %arg1, %c0_i32 : i32
    %c0_i32_0 = arith.constant 0 : i32
    %1 = arith.cmpi eq, %arg0, %c0_i32_0 : i32
    %2 = arith.andi %0, %1 : i1
    %3 = arith.extui %2 : i1 to i32
    %c0_i32_1 = arith.constant 0 : i32
    %4 = arith.cmpi ne, %3, %c0_i32_1 : i32
    scf.if %4 {
      %c0_14 = arith.constant 0 : index
      %c0_15 = arith.constant 0 : index
      %30 = vector.load %arg3[%c0_14, %c0_15] : memref<128x128xbf16, #tpu.memory_space<vmem>>, vector<128x128xbf16>
      %c0_16 = arith.constant 0 : index
      %c0_17 = arith.constant 0 : index
      %c0_18 = arith.constant 0 : index
      %31 = vector.load %arg4[%c0_16, %c0_17, %c0_18] : memref<1x128x128xbf16, #tpu.memory_space<vmem>>, vector<1x128x128xbf16>
      %32 = vector.shape_cast %31 : vector<1x128x128xbf16> to vector<128x128xbf16>
      %cst_19 = arith.constant dense<0.000000e+00> : vector<128x128xf32>
      %33 = tpu.matmul %30, %32, %cst_19 {dimension_numbers = #tpu.dot_dimension_numbers<[1], [0], [0], [1], [0, 0, 1, 1], [], []>} : vector<128x128xbf16>, vector<128x128xbf16>, vector<128x128xf32> -> vector<128x128xf32>
      %34 = arith.truncf %33 : vector<128x128xf32> to vector<128x128xbf16>
      %c0_20 = arith.constant 0 : index
      %c0_21 = arith.constant 0 : index
      %35 = vector.load %arg12[%c0_20, %c0_21] : memref<128x128xbf16, #tpu.memory_space<vmem>>, vector<128x128xbf16>
      tpu.vector_store %arg12[%c0_20, %c0_21], %34 {strides = array<i32>} : memref<128x128xbf16, #tpu.memory_space<vmem>>, vector<128x128xbf16>,
    } else {
    }
    %c0_i32_2 = arith.constant 0 : i32
    %5 = arith.cmpi eq, %arg1, %c0_i32_2 : i32
    %c0_i32_3 = arith.constant 0 : i32
    %6 = arith.cmpi sgt, %arg0, %c0_i32_3 : i32
    %7 = arith.andi %5, %6 : i1
    %8 = arith.extui %7 : i1 to i32
    %c0_i32_4 = arith.constant 0 : i32
    %9 = arith.cmpi ne, %8, %c0_i32_4 : i32
    scf.if %9 {
      %c0_14 = arith.constant 0 : index
      %c0_15 = arith.constant 0 : index
      %30 = vector.load %arg13[%c0_14, %c0_15] : memref<128x128xbf16, #tpu.memory_space<vmem>>, vector<128x128xbf16>
      %c0_16 = arith.constant 0 : index
      %c0_17 = arith.constant 0 : index
      %c0_18 = arith.constant 0 : index
      %31 = vector.load %arg4[%c0_16, %c0_17, %c0_18] : memref<1x128x128xbf16, #tpu.memory_space<vmem>>, vector<1x128x128xbf16>
      %32 = vector.shape_cast %31 : vector<1x128x128xbf16> to vector<128x128xbf16>
      %cst_19 = arith.constant dense<0.000000e+00> : vector<128x128xf32>
      %33 = tpu.matmul %30, %32, %cst_19 {dimension_numbers = #tpu.dot_dimension_numbers<[1], [0], [0], [1], [0, 0, 1, 1], [], []>} : vector<128x128xbf16>, vector<128x128xbf16>, vector<128x128xf32> -> vector<128x128xf32>
      %34 = arith.truncf %33 : vector<128x128xf32> to vector<128x128xbf16>
      %c0_20 = arith.constant 0 : index
      %c0_21 = arith.constant 0 : index
      %35 = vector.load %arg12[%c0_20, %c0_21] : memref<128x128xbf16, #tpu.memory_space<vmem>>, vector<128x128xbf16>
      tpu.vector_store %arg12[%c0_20, %c0_21], %34 {strides = array<i32>} : memref<128x128xbf16, #tpu.memory_space<vmem>>, vector<128x128xbf16>,
    } else {
    }
    %c128_i32 = arith.constant 128 : i32
    %10 = arith.muli %arg1, %c128_i32 : i32
    %11 = tpu.assume_multiple %10, 128 : i32
    %12 = arith.index_cast %11 : i32 to index
    %c0 = arith.constant 0 : index
    %13 = vector.load %arg2[%12, %c0] : memref<128x128xbf16, #tpu.memory_space<vmem>>, vector<128x128xbf16>
    %c0_5 = arith.constant 0 : index
    %c0_6 = arith.constant 0 : index
    %14 = vector.load %arg12[%c0_5, %c0_6] : memref<128x128xbf16, #tpu.memory_space<vmem>>, vector<128x128xbf16>
    %cst = arith.constant dense<0.000000e+00> : vector<128x128xf32>
    %15 = tpu.matmul %13, %14, %cst {dimension_numbers = #tpu.dot_dimension_numbers<[1], [0], [0], [1], [0, 0, 1, 1], [], []>} : vector<128x128xbf16>, vector<128x128xbf16>, vector<128x128xf32> -> vector<128x128xf32>
    %c0_7 = arith.constant 0 : index
    %c0_8 = arith.constant 0 : index
    %c0_9 = arith.constant 0 : index
    %16 = vector.load %arg5[%c0_7, %c0_8, %c0_9] : memref<1x1x128xf32, #tpu.memory_space<vmem>>, vector<1x1x128xf32>
    %17 = vector.shape_cast %16 : vector<1x1x128xf32> to vector<1x128xf32>
    %18 = vector.broadcast %17 : vector<1x128xf32> to vector<128x128xf32>
    %19 = arith.addf %15, %18 : vector<128x128xf32>
    %cst_10 = arith.constant 0.000000e+00 : f32
    %20 = vector.broadcast %cst_10 : f32 to vector<128x128xf32>
    %21 = arith.maximumf %19, %20 : vector<128x128xf32>
    %22 = arith.truncf %21 : vector<128x128xf32> to vector<128x128xbf16>
    %23 = arith.index_cast %11 : i32 to index
    %c0_11 = arith.constant 0 : index
    %24 = vector.load %arg13[%23, %c0_11] : memref<128x128xbf16, #tpu.memory_space<vmem>>, vector<128x128xbf16>
    tpu.vector_store %arg13[%23, %c0_11], %22 {strides = array<i32>} : memref<128x128xbf16, #tpu.memory_space<vmem>>, vector<128x128xbf16>,
    %c2_i32 = arith.constant 2 : i32
    %25 = arith.cmpi eq, %arg0, %c2_i32 : i32
    %c0_i32_12 = arith.constant 0 : i32
    %26 = arith.cmpi eq, %arg1, %c0_i32_12 : i32
    %27 = arith.andi %25, %26 : i1
    %28 = arith.extui %27 : i1 to i32
    %c0_i32_13 = arith.constant 0 : i32
    %29 = arith.cmpi ne, %28, %c0_i32_13 : i32
    scf.if %29 {
      %c0_14 = arith.constant 0 : index
      %c0_15 = arith.constant 0 : index
      %30 = vector.load %arg6[%c0_14, %c0_15] : memref<8x128xbf16, #tpu.memory_space<vmem>>, vector<8x128xbf16>
      %c0_16 = arith.constant 0 : index
      %c0_17 = arith.constant 0 : index
      %31 = vector.load %arg13[%c0_16, %c0_17] : memref<128x128xbf16, #tpu.memory_space<vmem>>, vector<128x128xbf16>
      %cst_18 = arith.constant dense<0.000000e+00> : vector<8x128xf32>
      %32 = tpu.matmul %30, %31, %cst_18 {dimension_numbers = #tpu.dot_dimension_numbers<[1], [0], [0], [1], [0, 0, 1, 1], [], []>} : vector<8x128xbf16>, vector<128x128xbf16>, vector<8x128xf32> -> vector<8x128xf32>
      %33 = arith.truncf %32 : vector<8x128xf32> to vector<8x128xbf16>
      %c0_19 = arith.constant 0 : index
      %c0_20 = arith.constant 0 : index
      %34 = vector.load %arg7[%c0_19, %c0_20] : memref<128x128xbf16, #tpu.memory_space<vmem>>, vector<128x128xbf16>
      %cst_21 = arith.constant dense<0.000000e+00> : vector<8x128xf32>
      %35 = tpu.matmul %33, %34, %cst_21 {dimension_numbers = #tpu.dot_dimension_numbers<[1], [0], [0], [1], [0, 0, 1, 1], [], []>} : vector<8x128xbf16>, vector<128x128xbf16>, vector<8x128xf32> -> vector<8x128xf32>
      %c0_22 = arith.constant 0 : index
      %c0_23 = arith.constant 0 : index
      %36 = vector.load %arg8[%c0_22, %c0_23] : memref<1x128xf32, #tpu.memory_space<vmem>>, vector<1x128xf32>
      %37 = vector.broadcast %36 : vector<1x128xf32> to vector<8x128xf32>
      %38 = arith.addf %35, %37 : vector<8x128xf32>
      %cst_24 = arith.constant 0.000000e+00 : f32
      %39 = vector.broadcast %cst_24 : f32 to vector<8x128xf32>
      %40 = arith.maximumf %38, %39 : vector<8x128xf32>
      %41 = arith.truncf %40 : vector<8x128xf32> to vector<8x128xbf16>
      %c0_25 = arith.constant 0 : index
      %c0_26 = arith.constant 0 : index
      %42 = vector.load %arg9[%c0_25, %c0_26] : memref<128x128xbf16, #tpu.memory_space<vmem>>, vector<128x128xbf16>
      %cst_27 = arith.constant dense<0.000000e+00> : vector<8x128xf32>
      %43 = tpu.matmul %41, %42, %cst_27 {dimension_numbers = #tpu.dot_dimension_numbers<[1], [0], [0], [1], [0, 0, 1, 1], [], []>} : vector<8x128xbf16>, vector<128x128xbf16>, vector<8x128xf32> -> vector<8x128xf32>
      %c0_28 = arith.constant 0 : index
      %c0_29 = arith.constant 0 : index
      %44 = vector.load %arg10[%c0_28, %c0_29] : memref<1x128xf32, #tpu.memory_space<vmem>>, vector<1x128xf32>
      %45 = vector.broadcast %44 : vector<1x128xf32> to vector<8x128xf32>
      %46 = arith.addf %43, %45 : vector<8x128xf32>
      %c0_30 = arith.constant 0 : index
      %c0_31 = arith.constant 0 : index
      %47 = vector.load %arg11[%c0_30, %c0_31] : memref<8x128xf32, #tpu.memory_space<vmem>>, vector<8x128xf32>
      tpu.vector_store %arg11[%c0_30, %c0_31], %46 {strides = array<i32>} : memref<8x128xf32, #tpu.memory_space<vmem>>, vector<8x128xf32>,
    } else {
    }
    return
  }
  func.func @transform_0(%arg0: i32, %arg1: i32) -> (i32, i32) {
    %c0_i32 = arith.constant 0 : i32
    %c0_i32_0 = arith.constant 0 : i32
    %c0_i32_1 = arith.constant 0 : i32
    return %c0_i32, %c0_i32_0 : i32, i32
  }
  func.func @transform_1(%arg0: i32, %arg1: i32) -> (i32, i32) {
    %c0_i32 = arith.constant 0 : i32
    %c0_i32_0 = arith.constant 0 : i32
    %c0_i32_1 = arith.constant 0 : i32
    return %c0_i32, %c0_i32_0 : i32, i32
  }
  func.func @transform_2(%arg0: i32, %arg1: i32) -> (i32, i32, i32) {
    %c0_i32 = arith.constant 0 : i32
    %c0_i32_0 = arith.constant 0 : i32
    %c0_i32_1 = arith.constant 0 : i32
    return %arg0, %c0_i32, %c0_i32_0 : i32, i32, i32
  }
  func.func @transform_3(%arg0: i32, %arg1: i32) -> (i32, i32, i32) {
    %c0_i32 = arith.constant 0 : i32
    %c0_i32_0 = arith.constant 0 : i32
    %c0_i32_1 = arith.constant 0 : i32
    return %arg0, %c0_i32, %c0_i32_0 : i32, i32, i32
  }
  func.func @transform_4(%arg0: i32, %arg1: i32) -> (i32, i32) {
    %c0_i32 = arith.constant 0 : i32
    %c0_i32_0 = arith.constant 0 : i32
    %c0_i32_1 = arith.constant 0 : i32
    return %c0_i32, %c0_i32_0 : i32, i32
  }
  func.func @transform_5(%arg0: i32, %arg1: i32) -> (i32, i32) {
    %c0_i32 = arith.constant 0 : i32
    %c0_i32_0 = arith.constant 0 : i32
    %c0_i32_1 = arith.constant 0 : i32
    return %c0_i32, %c0_i32_0 : i32, i32
  }
  func.func @transform_6(%arg0: i32, %arg1: i32) -> (i32, i32) {
    %c0_i32 = arith.constant 0 : i32
    %c0_i32_0 = arith.constant 0 : i32
    %c0_i32_1 = arith.constant 0 : i32
    return %c0_i32, %c0_i32_0 : i32, i32
  }
  func.func @transform_7(%arg0: i32, %arg1: i32) -> (i32, i32) {
    %c0_i32 = arith.constant 0 : i32
    %c0_i32_0 = arith.constant 0 : i32
    %c0_i32_1 = arith.constant 0 : i32
    return %c0_i32, %c0_i32_0 : i32, i32
  }
  func.func @transform_8(%arg0: i32, %arg1: i32) -> (i32, i32) {
    %c0_i32 = arith.constant 0 : i32
    %c0_i32_0 = arith.constant 0 : i32
    %c0_i32_1 = arith.constant 0 : i32
    return %c0_i32, %c0_i32_0 : i32, i32
  }
  func.func @transform_9(%arg0: i32, %arg1: i32) -> (i32, i32) {
    %c0_i32 = arith.constant 0 : i32
    %c0_i32_0 = arith.constant 0 : i32
    %c0_i32_1 = arith.constant 0 : i32
    return %c0_i32, %c0_i32_0 : i32, i32
  }
}

</mosaic_0001>

<llo_original>
// kernel: gcn_forward.1
$region0: #{gcn_forward.1}
  #allocation0 [shape = 'u32[]', space=smem, size = 0x4, offset = 0x4, fixed_abs, tag = 'smem constant byte address 0x4 - core index']
  #allocation1 [shape = 'u32[72,128]{1,0:T(1,128)}', space=vmem, size = 0x9000, scoped, tag = 'internal scratch']
  #allocation2 [shape = 'bf16[128,128]{1,0:T(8,128)(2,1)}', space=vmem, size = 0x8000, scoped, tag = 'scratch operand']
  #allocation3 [shape = 'bf16[128,128]{1,0:T(8,128)(2,1)}', space=vmem, size = 0x8000, scoped, tag = 'scratch operand']
  %s0 = inlined_call_operand.vmem [shape: bf16[128,128], index: 0, kind: input, shape index: {}]
  %s1 = inlined_call_operand.vmem [shape: bf16[128,128], index: 1, kind: input, shape index: {}]
  %s2 = inlined_call_operand.vmem [shape: bf16[3,128,128], index: 2, kind: input, shape index: {}]
  %s3 = inlined_call_operand.vmem [shape: f32[3,1,128], index: 3, kind: input, shape index: {}]
  %s4 = inlined_call_operand.vmem [shape: bf16[8,128], index: 4, kind: input, shape index: {}]
  %s5 = inlined_call_operand.vmem [shape: bf16[128,128], index: 5, kind: input, shape index: {}]
  %s6 = inlined_call_operand.vmem [shape: f32[1,128], index: 6, kind: input, shape index: {}]
  %s7 = inlined_call_operand.vmem [shape: bf16[128,128], index: 7, kind: input, shape index: {}]
  %s8 = inlined_call_operand.vmem [shape: f32[1,128], index: 8, kind: input, shape index: {}]
  %s9 = inlined_call_operand.vmem [shape: f32[8,128], index: 9, kind: output, shape index: {}]
  %s10 = sld [smem:[#allocation0]]
  $region81: #{gcn_forward.1} parent=0
    _
  %s12 = ssub.s32 1, %s10
  %s13 = scalar_select 0, %s12, %s10
  loop: start=0, step=1, limit=5
  $region2: #{gcn_forward.1} parent=0 // loop_pre_header
    _
  $region3: #{gcn_forward.1} parent=0 // loop_header
    %s15 = sphi 0, %s19
    %p16 = scmp.ge.s32.totalorder %s15, 5
    %s22 = sphi 0, %s34
    %s23 = sphi 0, %s30
    %s24 = sphi 0, %s22
    %s25 = sphi 0, %s23
    %s26 = sphi 0, %s24
    %s27 = sphi 0, %s25
    %s35 = sphi 0, %s35
    %s37 = sphi 0, %s35
    %s38 = sphi 0, %s37
    %s52 = sphi 0, %s38
    %s56 = sphi 0, %s56
    %s58 = sphi 0, %s56
    %s59 = sphi 0, %s58
    %s73 = sphi 0, %s59
    %s79 = sphi 0, %s81
    %s82 = sphi 0, %s79
    %s83 = sphi 0, %s82
    %s99 = sphi 0, %s83
    %s105 = sphi 0, %s107
    %s108 = sphi 0, %s105
    %s109 = sphi 0, %s108
    %s125 = sphi 0, %s109
    %s129 = sphi 0, %s129
    %s131 = sphi 0, %s129
    %s132 = sphi 0, %s131
    %s146 = sphi 0, %s132
    %s150 = sphi 0, %s150
    %s152 = sphi 0, %s150
    %s153 = sphi 0, %s152
    %s167 = sphi 0, %s153
    %s171 = sphi 0, %s171
    %s173 = sphi 0, %s171
    %s174 = sphi 0, %s173
    %s188 = sphi 0, %s174
    %s192 = sphi 0, %s192
    %s194 = sphi 0, %s192
    %s195 = sphi 0, %s194
    %s209 = sphi 0, %s195
    %s213 = sphi 0, %s213
    %s215 = sphi 0, %s213
    %s216 = sphi 0, %s215
    %s230 = sphi 0, %s216
    %s234 = sphi 0, %s234
    %s236 = sphi 0, %s234
    %s237 = sphi 0, %s236
    %s251 = sphi 0, %s237
  $region4: #{gcn_forward.1} parent=0 // loop_header_branch
    %18 = sbr.rel (%p16) target = $region8
  $region5: #{gcn_forward.1} parent=0 // loop_body
    %s20 = ssub.s32 %s15, 1
    %s21 = ssub.s32 %s15, 2
    %s28 = sadd.s32 1, %s23
    %p29 = scmp.ge.s32.totalorder %s28, 1
    %s30 = scalar_select %p29, 0, %s28
    %s31 = sadd.s32 1, %s22
    %s32 = scalar_select %p29, %s31, %s22
    %p33 = scmp.ge.s32.totalorder %s32, 3
    %s34 = scalar_select %p33, 0, %s32
    %s36 = sadd.s32 %s35, 1
    %p39 = scmp.eq.s32.totalorder %s15, 2
    %p40 = scmp.ne.s32.totalorder %s35, %s37
    %p41 = scmp.eq.s32.totalorder %s15, 0
    %p42 = por %p40, %p41
    %p43 = scmp.ne.s32.totalorder %s35, %s37
    %p44 = scmp.eq.s32.totalorder %s20, 2
    %p45 = por %p43, %p44
    %p46 = scmp.ne.s32.totalorder %s37, %s38
    %p47 = scmp.eq.s32.totalorder %s20, 0
    %p48 = por %p46, %p47
    %p49 = scmp.ne.s32.totalorder %s37, %s38
    %p50 = scmp.eq.s32.totalorder %s21, 2
    %p51 = por %p49, %p50
    %p53 = scmp.ne.s32.totalorder %s38, %s52
    %p54 = scmp.eq.s32.totalorder %s21, 0
    %p55 = por %p53, %p54
    %s57 = sadd.s32 %s56, 1
    %p60 = scmp.eq.s32.totalorder %s15, 2
    %p61 = scmp.ne.s32.totalorder %s56, %s58
    %p62 = scmp.eq.s32.totalorder %s15, 0
    %p63 = por %p61, %p62
    %p64 = scmp.ne.s32.totalorder %s56, %s58
    %p65 = scmp.eq.s32.totalorder %s20, 2
    %p66 = por %p64, %p65
    %p67 = scmp.ne.s32.totalorder %s58, %s59
    %p68 = scmp.eq.s32.totalorder %s20, 0
    %p69 = por %p67, %p68
    %p70 = scmp.ne.s32.totalorder %s58, %s59
    %p71 = scmp.eq.s32.totalorder %s21, 2
    %p72 = por %p70, %p71
    %p74 = scmp.ne.s32.totalorder %s59, %s73
    %p75 = scmp.eq.s32.totalorder %s21, 0
    %p76 = por %p74, %p75
    %s77 = ssub.s32 %s22, %s34
    %p78 = scmp.eq.s32.totalorder %s77, 0
    %s80 = sadd.s32 %s79, 1
    %s81 = scalar_select %p78, %s79, %s80
    %p84 = pneg %p78
    %p85 = scmp.eq.s32.totalorder %s15, 2
    %p86 = por %p84, %p85
    %p87 = scmp.ne.s32.totalorder %s79, %s82
    %p88 = scmp.eq.s32.totalorder %s15, 0
    %p89 = por %p87, %p88
    %p90 = scmp.ne.s32.totalorder %s79, %s82
    %p91 = scmp.eq.s32.totalorder %s20, 2
    %p92 = por %p90, %p91
    %p93 = scmp.ne.s32.totalorder %s82, %s83
    %p94 = scmp.eq.s32.totalorder %s20, 0
    %p95 = por %p93, %p94
    %p96 = scmp.ne.s32.totalorder %s82, %s83
    %p97 = scmp.eq.s32.totalorder %s21, 2
    %p98 = por %p96, %p97
    %p100 = scmp.ne.s32.totalorder %s83, %s99
    %p101 = scmp.eq.s32.totalorder %s21, 0
    %p102 = por %p100, %p101
    %s103 = ssub.s32 %s22, %s34
    %p104 = scmp.eq.s32.totalorder %s103, 0
    %s106 = sadd.s32 %s105, 1
    %s107 = scalar_select %p104, %s105, %s106
    %p110 = pneg %p104
    %p111 = scmp.eq.s32.totalorder %s15, 2
    %p112 = por %p110, %p111
    %p113 = scmp.ne.s32.totalorder %s105, %s108
    %p114 = scmp.eq.s32.totalorder %s15, 0
    %p115 = por %p113, %p114
    %p116 = scmp.ne.s32.totalorder %s105, %s108
    %p117 = scmp.eq.s32.totalorder %s20, 2
    %p118 = por %p116, %p117
    %p119 = scmp.ne.s32.totalorder %s108, %s109
    %p120 = scmp.eq.s32.totalorder %s20, 0
    %p121 = por %p119, %p120
    %p122 = scmp.ne.s32.totalorder %s108, %s109
    %p123 = scmp.eq.s32.totalorder %s21, 2
    %p124 = por %p122, %p123
    %p126 = scmp.ne.s32.totalorder %s109, %s125
    %p127 = scmp.eq.s32.totalorder %s21, 0
    %p128 = por %p126, %p127
    %s130 = sadd.s32 %s129, 1
    %p133 = scmp.eq.s32.totalorder %s15, 2
    %p134 = scmp.ne.s32.totalorder %s129, %s131
    %p135 = scmp.eq.s32.totalorder %s15, 0
    %p136 = por %p134, %p135
    %p137 = scmp.ne.s32.totalorder %s129, %s131
    %p138 = scmp.eq.s32.totalorder %s20, 2
    %p139 = por %p137, %p138
    %p140 = scmp.ne.s32.totalorder %s131, %s132
    %p141 = scmp.eq.s32.totalorder %s20, 0
    %p142 = por %p140, %p141
    %p143 = scmp.ne.s32.totalorder %s131, %s132
    %p144 = scmp.eq.s32.totalorder %s21, 2
    %p145 = por %p143, %p144
    %p147 = scmp.ne.s32.totalorder %s132, %s146
    %p148 = scmp.eq.s32.totalorder %s21, 0
    %p149 = por %p147, %p148
    %s151 = sadd.s32 %s150, 1
    %p154 = scmp.eq.s32.totalorder %s15, 2
    %p155 = scmp.ne.s32.totalorder %s150, %s152
    %p156 = scmp.eq.s32.totalorder %s15, 0
    %p157 = por %p155, %p156
    %p158 = scmp.ne.s32.totalorder %s150, %s152
    %p159 = scmp.eq.s32.totalorder %s20, 2
    %p160 = por %p158, %p159
    %p161 = scmp.ne.s32.totalorder %s152, %s153
    %p162 = scmp.eq.s32.totalorder %s20, 0
    %p163 = por %p161, %p162
    %p164 = scmp.ne.s32.totalorder %s152, %s153
    %p165 = scmp.eq.s32.totalorder %s21, 2
    %p166 = por %p164, %p165
    %p168 = scmp.ne.s32.totalorder %s153, %s167
    %p169 = scmp.eq.s32.totalorder %s21, 0
    %p170 = por %p168, %p169
    %s172 = sadd.s32 %s171, 1
    %p175 = scmp.eq.s32.totalorder %s15, 2
    %p176 = scmp.ne.s32.totalorder %s171, %s173
    %p177 = scmp.eq.s32.totalorder %s15, 0
    %p178 = por %p176, %p177
    %p179 = scmp.ne.s32.totalorder %s171, %s173
    %p180 = scmp.eq.s32.totalorder %s20, 2
    %p181 = por %p179, %p180
    %p182 = scmp.ne.s32.totalorder %s173, %s174
    %p183 = scmp.eq.s32.totalorder %s20, 0
    %p184 = por %p182, %p183
    %p185 = scmp.ne.s32.totalorder %s173, %s174
    %p186 = scmp.eq.s32.totalorder %s21, 2
    %p187 = por %p185, %p186
    %p189 = scmp.ne.s32.totalorder %s174, %s188
    %p190 = scmp.eq.s32.totalorder %s21, 0
    %p191 = por %p189, %p190
    %s193 = sadd.s32 %s192, 1
    %p196 = scmp.eq.s32.totalorder %s15, 2
    %p197 = scmp.ne.s32.totalorder %s192, %s194
    %p198 = scmp.eq.s32.totalorder %s15, 0
    %p199 = por %p197, %p198
    %p200 = scmp.ne.s32.totalorder %s192, %s194
    %p201 = scmp.eq.s32.totalorder %s20, 2
    %p202 = por %p200, %p201
    %p203 = scmp.ne.s32.totalorder %s194, %s195
    %p204 = scmp.eq.s32.totalorder %s20, 0
    %p205 = por %p203, %p204
    %p206 = scmp.ne.s32.totalorder %s194, %s195
    %p207 = scmp.eq.s32.totalorder %s21, 2
    %p208 = por %p206, %p207
    %p210 = scmp.ne.s32.totalorder %s195, %s209
    %p211 = scmp.eq.s32.totalorder %s21, 0
    %p212 = por %p210, %p211
    %s214 = sadd.s32 %s213, 1
    %p217 = scmp.eq.s32.totalorder %s15, 2
    %p218 = scmp.ne.s32.totalorder %s213, %s215
    %p219 = scmp.eq.s32.totalorder %s15, 0
    %p220 = por %p218, %p219
    %p221 = scmp.ne.s32.totalorder %s213, %s215
    %p222 = scmp.eq.s32.totalorder %s20, 2
    %p223 = por %p221, %p222
    %p224 = scmp.ne.s32.totalorder %s215, %s216
    %p225 = scmp.eq.s32.totalorder %s20, 0
    %p226 = por %p224, %p225
    %p227 = scmp.ne.s32.totalorder %s215, %s216
    %p228 = scmp.eq.s32.totalorder %s21, 2
    %p229 = por %p227, %p228
    %p231 = scmp.ne.s32.totalorder %s216, %s230
    %p232 = scmp.eq.s32.totalorder %s21, 0
    %p233 = por %p231, %p232
    %s235 = sadd.s32 %s234, 1
    %p238 = scmp.eq.s32.totalorder %s15, 2
    %p239 = scmp.ne.s32.totalorder %s234, %s236
    %p240 = scmp.eq.s32.totalorder %s15, 0
    %p241 = por %p239, %p240
    %p242 = scmp.ne.s32.totalorder %s234, %s236
    %p243 = scmp.eq.s32.totalorder %s20, 2
    %p244 = por %p242, %p243
    %p245 = scmp.ne.s32.totalorder %s236, %s237
    %p246 = scmp.eq.s32.totalorder %s20, 0
    %p247 = por %p245, %p246
    %p248 = scmp.ne.s32.totalorder %s236, %s237
    %p249 = scmp.eq.s32.totalorder %s21, 2
    %p250 = por %p248, %p249
    %p252 = scmp.ne.s32.totalorder %s237, %s251
    %p253 = scmp.eq.s32.totalorder %s21, 0
    %p254 = por %p252, %p253
    %p255 = scmp.le.s32.totalorder 1, %s15
    %p256 = scmp.lt.s32.totalorder %s15, 4
    %p257 = pnand %p255, %p256
    %p258 = pneg %p257
    // Predicated region
    $region9: #{gcn_forward.1} parent=5 // pred_check
      _
    $region10: #{gcn_forward.1} parent=5 // pred_check_branch
      %260 = sbr.rel (%p257) target = $region12
    $region11: #{gcn_forward.1} parent=5 // pred_region
      %s261 = ssub.s32 %s15, 1
      // Predicated region
      $region13: #{gcn_forward.1} parent=11 // pred_check
        %p262 = pneg %p48
      $region14: #{gcn_forward.1} parent=11 // pred_check_branch
        %264 = sbr.rel (%p262) target = $region16
      $region15: #{gcn_forward.1} parent=11 // pred_region
        _
      $region16: #{gcn_forward.1} parent=11 // pred_fallthru
        _
      // Predicated region
      $region17: #{gcn_forward.1} parent=11 // pred_check
        %p265 = pneg %p69
      $region18: #{gcn_forward.1} parent=11 // pred_check_branch
        %267 = sbr.rel (%p265) target = $region20
      $region19: #{gcn_forward.1} parent=11 // pred_region
        _
      $region20: #{gcn_forward.1} parent=11 // pred_fallthru
        _
      // Predicated region
      $region21: #{gcn_forward.1} parent=11 // pred_check
        %p268 = pneg %p142
      $region22: #{gcn_forward.1} parent=11 // pred_check_branch
        %270 = sbr.rel (%p268) target = $region24
      $region23: #{gcn_forward.1} parent=11 // pred_region
        _
      $region24: #{gcn_forward.1} parent=11 // pred_fallthru
        _
      // Predicated region
      $region25: #{gcn_forward.1} parent=11 // pred_check
        %p271 = pneg %p163
      $region26: #{gcn_forward.1} parent=11 // pred_check_branch
        %273 = sbr.rel (%p271) target = $region28
      $region27: #{gcn_forward.1} parent=11 // pred_region
        _
      $region28: #{gcn_forward.1} parent=11 // pred_fallthru
        _
      // Predicated region
      $region29: #{gcn_forward.1} parent=11 // pred_check
        %p274 = pneg %p184
      $region30: #{gcn_forward.1} parent=11 // pred_check_branch
        %276 = sbr.rel (%p274) target = $region32
      $region31: #{gcn_forward.1} parent=11 // pred_region
        _
      $region32: #{gcn_forward.1} parent=11 // pred_fallthru
        _
      // Predicated region
      $region33: #{gcn_forward.1} parent=11 // pred_check
        %p277 = pneg %p205
      $region34: #{gcn_forward.1} parent=11 // pred_check_branch
        %279 = sbr.rel (%p277) target = $region36
      $region35: #{gcn_forward.1} parent=11 // pred_region
        _
      $region36: #{gcn_forward.1} parent=11 // pred_fallthru
        _
      // Predicated region
      $region37: #{gcn_forward.1} parent=11 // pred_check
        %p280 = pneg %p226
      $region38: #{gcn_forward.1} parent=11 // pred_check_branch
        %282 = sbr.rel (%p280) target = $region40
      $region39: #{gcn_forward.1} parent=11 // pred_region
        _
      $region40: #{gcn_forward.1} parent=11 // pred_fallthru
        _
    $region12: #{gcn_forward.1} parent=5 // pred_fallthru
      _
    %p283 = scmp.lt.s32.totalorder %s15, 3
    // Predicated region
    $region41: #{gcn_forward.1} parent=5 // pred_check
      %p284 = pneg %p283
    $region42: #{gcn_forward.1} parent=5 // pred_check_branch
      %286 = sbr.rel (%p284) target = $region44
    $region43: #{gcn_forward.1} parent=5 // pred_region
      // Predicated region
      $region45: #{gcn_forward.1} parent=43 // pred_check
        %p287 = pneg %p89
      $region46: #{gcn_forward.1} parent=43 // pred_check_branch
        %289 = sbr.rel (%p287) target = $region48
      $region47: #{gcn_forward.1} parent=43 // pred_region
        %p290 = scmp.lt.s32.totalorder %s22, 2
        %s291 = scalar_select %p290, %s22, 2
        %s292 = smul.addr %s291, 16
        %s293 = smul.addr %s292, 4
        %s294 = scalar_lea.vmem %s2, %s293
      $region48: #{gcn_forward.1} parent=43 // pred_fallthru
        _
      // Predicated region
      $region49: #{gcn_forward.1} parent=43 // pred_check
        %p295 = pneg %p115
      $region50: #{gcn_forward.1} parent=43 // pred_check_branch
        %297 = sbr.rel (%p295) target = $region52
      $region51: #{gcn_forward.1} parent=43 // pred_region
        %p298 = scmp.lt.s32.totalorder %s22, 2
        %s299 = scalar_select %p298, %s22, 2
        %s300 = scalar_lea.vmem %s3, %s299
      $region52: #{gcn_forward.1} parent=43 // pred_fallthru
        _
    $region44: #{gcn_forward.1} parent=5 // pred_fallthru
      _
    %p301 = scmp.le.s32.totalorder 1, %s15
    %p302 = scmp.lt.s32.totalorder %s15, 4
    %p303 = pnand %p301, %p302
    %p304 = pneg %p303
    // Predicated region
    $region53: #{gcn_forward.1} parent=5 // pred_check
      _
    $region54: #{gcn_forward.1} parent=5 // pred_check_branch
      %306 = sbr.rel (%p303) target = $region56
    $region55: #{gcn_forward.1} parent=5 // pred_region
      %s307 = ssub.s32 %s15, 1
      %p308 = pneg %p48
      %p309 = pneg %p45
      %p310 = pneg %p69
      %p311 = pneg %p66
      %p312 = scmp.lt.s32.totalorder %s24, 2
      %s313 = scalar_select %p312, %s24, 2
      %s314 = smul.addr %s313, 16
      %s315 = smul.addr %s314, 4
      %s316 = scalar_lea.vmem %s2, %s315
      %p317 = pneg %p95
      %p318 = pneg %p92
      %p319 = scmp.lt.s32.totalorder %s24, 2
      %s320 = scalar_select %p319, %s24, 2
      %s321 = scalar_lea.vmem %s3, %s320
      %p322 = pneg %p121
      %p323 = pneg %p118
      %p324 = pneg %p142
      %p325 = pneg %p139
      %p326 = pneg %p163
      %p327 = pneg %p160
      %p328 = pneg %p184
      %p329 = pneg %p181
      %p330 = pneg %p205
      %p331 = pneg %p202
      %p332 = pneg %p226
      %p333 = pneg %p223
      %p334 = pneg %p247
      %p335 = pneg %p244
      %p336 = scmp.lt.s32.totalorder %s24, 2
      %s337 = scalar_select %p336, %s24, 2
      %s338 = smul.addr %s337, 16
      %s339 = smul.addr %s338, 4
      %s340 = scalar_lea.vmem %s2, %s339
      %p341 = scmp.lt.s32.totalorder %s24, 2
      %s342 = scalar_select %p341, %s24, 2
      %s343 = scalar_lea.vmem %s3, %s342
      %p344 = scmp.eq.s32.totalorder %s25, 0
      %p345 = scmp.eq.s32.totalorder %s24, 0
      %p346 = pnand %p344, %p345
      %p347 = pneg %p346
      // Predicated region
      $region57: #{gcn_forward.1} parent=55 // pred_check
        _
      $region58: #{gcn_forward.1} parent=55 // pred_check_branch
        %349 = sbr.rel (%p346) target = $region60
      $region59: #{gcn_forward.1} parent=55 // pred_region
        %v350 = vld [vmem:[%s1] sm:$0xf]
        %v351 = vld [vmem:[%s1 + $0x4] sm:$0xf]
        %v352 = vld [vmem:[%s1 + $0x8] sm:$0xf]
        %v353 = vld [vmem:[%s1 + $0xc] sm:$0xf]
        %v354 = vld [vmem:[%s1 + $0x10] sm:$0xf]
        %v355 = vld [vmem:[%s1 + $0x14] sm:$0xf]
        %v356 = vld [vmem:[%s1 + $0x18] sm:$0xf]
        %v357 = vld [vmem:[%s1 + $0x1c] sm:$0xf]
        %v358 = vld [vmem:[%s1 + $0x20] sm:$0xf]
        %v359 = vld [vmem:[%s1 + $0x24] sm:$0xf]
        %v360 = vld [vmem:[%s1 + $0x28] sm:$0xf]
        %v361 = vld [vmem:[%s1 + $0x2c] sm:$0xf]
        %v362 = vld [vmem:[%s1 + $0x30] sm:$0xf]
        %v363 = vld [vmem:[%s1 + $0x34] sm:$0xf]
        %v364 = vld [vmem:[%s1 + $0x38] sm:$0xf]
        %v365 = vld [vmem:[%s1 + $0x3c] sm:$0xf]
        %v366 = vld [vmem:[%s340] sm:$0xf]
        %v367 = vld [vmem:[%s340 + $0x4] sm:$0xf]
        %v368 = vld [vmem:[%s340 + $0x8] sm:$0xf]
        %v369 = vld [vmem:[%s340 + $0xc] sm:$0xf]
        %v370 = vld [vmem:[%s340 + $0x10] sm:$0xf]
        %v371 = vld [vmem:[%s340 + $0x14] sm:$0xf]
        %v372 = vld [vmem:[%s340 + $0x18] sm:$0xf]
        %v373 = vld [vmem:[%s340 + $0x1c] sm:$0xf]
        %v374 = vld [vmem:[%s340 + $0x20] sm:$0xf]
        %v375 = vld [vmem:[%s340 + $0x24] sm:$0xf]
        %v376 = vld [vmem:[%s340 + $0x28] sm:$0xf]
        %v377 = vld [vmem:[%s340 + $0x2c] sm:$0xf]
        %v378 = vld [vmem:[%s340 + $0x30] sm:$0xf]
        %v379 = vld [vmem:[%s340 + $0x34] sm:$0xf]
        %v380 = vld [vmem:[%s340 + $0x38] sm:$0xf]
        %v381 = vld [vmem:[%s340 + $0x3c] sm:$0xf]
        %v398 = vunpack.c.l.b16 %v350
        %v399 = vunpack.c.l.b16 %v351
        %v400 = vunpack.c.l.b16 %v352
        %v401 = vunpack.c.l.b16 %v353
        %v402 = vunpack.c.l.b16 %v354
        %v403 = vunpack.c.l.b16 %v355
        %v404 = vunpack.c.l.b16 %v356
        %v405 = vunpack.c.l.b16 %v357
        %v406 = vunpack.c.l.b16 %v358
        %v407 = vunpack.c.l.b16 %v359
        %v408 = vunpack.c.l.b16 %v360
        %v409 = vunpack.c.l.b16 %v361
        %v410 = vunpack.c.l.b16 %v362
        %v411 = vunpack.c.l.b16 %v363
        %v412 = vunpack.c.l.b16 %v364
        %v413 = vunpack.c.l.b16 %v365
        %v414 = vpack.c.b16 %v399, %v398
        %v415 = vpack.c.b16 %v401, %v400
        %v416 = vpack.c.b16 %v403, %v402
        %v417 = vpack.c.b16 %v405, %v404
        %v418 = vpack.c.b16 %v407, %v406
        %v419 = vpack.c.b16 %v409, %v408
        %v420 = vpack.c.b16 %v411, %v410
        %v421 = vpack.c.b16 %v413, %v412
        %v446 = vunpack.c.l.b16 %v366
        %v447 = vunpack.c.l.b16 %v367
        %v448 = vunpack.c.l.b16 %v368
        %v449 = vunpack.c.l.b16 %v369
        %v450 = vunpack.c.l.b16 %v370
        %v451 = vunpack.c.l.b16 %v371
        %v452 = vunpack.c.l.b16 %v372
        %v453 = vunpack.c.l.b16 %v373
        %v454 = vunpack.c.l.b16 %v374
        %v455 = vunpack.c.l.b16 %v375
        %v456 = vunpack.c.l.b16 %v376
        %v457 = vunpack.c.l.b16 %v377
        %v458 = vunpack.c.l.b16 %v378
        %v459 = vunpack.c.l.b16 %v379
        %v460 = vunpack.c.l.b16 %v380
        %v461 = vunpack.c.l.b16 %v381
        %v462 = vpack.c.b16 %v447, %v446
        %v463 = vpack.c.b16 %v449, %v448
        %v464 = vpack.c.b16 %v451, %v450
        %v465 = vpack.c.b16 %v453, %v452
        %v466 = vpack.c.b16 %v455, %v454
        %v467 = vpack.c.b16 %v457, %v456
        %v468 = vpack.c.b16 %v459, %v458
        %v469 = vpack.c.b16 %v461, %v460
        %478 = vmatpush.bf16.msra.mxu0 %v469
        %479 = vmatpush.bf16.msra.mxu0 %v468
        %480 = vmatpush.bf16.msra.mxu0 %v467
        %481 = vmatpush.bf16.msra.mxu0 %v466
        %482 = vmatpush.bf16.msra.mxu0 %v465
        %483 = vmatpush.bf16.msra.mxu0 %v464
        %484 = vmatpush.bf16.msra.mxu0 %v463
        %485 = vmatpush.bf16.msra.mxu0 %v462
        %486 = vmatmul.bf16.gmra.mxu0 %v414
        %v487 = vpop.f32.mrf.mxu0
        %v488 = vadd.f32 0.0, %v487
        %v489 = vpop.f32.mrf.mxu0
        %v490 = vadd.f32 0.0, %v489
        %491 = vmatmul.bf16.gmra.mxu0 %v415
        %v492 = vpop.f32.mrf.mxu0
        %v493 = vadd.f32 0.0, %v492
        %v494 = vpop.f32.mrf.mxu0
        %v495 = vadd.f32 0.0, %v494
        %496 = vmatmul.bf16.gmra.mxu0 %v416
        %v497 = vpop.f32.mrf.mxu0
        %v498 = vadd.f32 0.0, %v497
        %v499 = vpop.f32.mrf.mxu0
        %v500 = vadd.f32 0.0, %v499
        %501 = vmatmul.bf16.gmra.mxu0 %v417
        %v502 = vpop.f32.mrf.mxu0
        %v503 = vadd.f32 0.0, %v502
        %v504 = vpop.f32.mrf.mxu0
        %v505 = vadd.f32 0.0, %v504
        %506 = vmatmul.bf16.gmra.mxu0 %v418
        %v507 = vpop.f32.mrf.mxu0
        %v508 = vadd.f32 0.0, %v507
        %v509 = vpop.f32.mrf.mxu0
        %v510 = vadd.f32 0.0, %v509
        %511 = vmatmul.bf16.gmra.mxu0 %v419
        %v512 = vpop.f32.mrf.mxu0
        %v513 = vadd.f32 0.0, %v512
        %v514 = vpop.f32.mrf.mxu0
        %v515 = vadd.f32 0.0, %v514
        %516 = vmatmul.bf16.gmra.mxu0 %v420
        %v517 = vpop.f32.mrf.mxu0
        %v518 = vadd.f32 0.0, %v517
        %v519 = vpop.f32.mrf.mxu0
        %v520 = vadd.f32 0.0, %v519
        %521 = vmatmul.bf16.gmra.mxu0 %v421
        %v522 = vpop.f32.mrf.mxu0
        %v523 = vadd.f32 0.0, %v522
        %v524 = vpop.f32.mrf.mxu0
        %v525 = vadd.f32 0.0, %v524
        %526 = vdwg.mxu0
        %v527 = vpack.c.bf16 %v488, %v488
        %v528 = vpack.c.bf16 %v490, %v490
        %v529 = vpack.c.bf16 %v493, %v493
        %v530 = vpack.c.bf16 %v495, %v495
        %v531 = vpack.c.bf16 %v498, %v498
        %v532 = vpack.c.bf16 %v500, %v500
        %v533 = vpack.c.bf16 %v503, %v503
        %v534 = vpack.c.bf16 %v505, %v505
        %v535 = vpack.c.bf16 %v508, %v508
        %v536 = vpack.c.bf16 %v510, %v510
        %v537 = vpack.c.bf16 %v513, %v513
        %v538 = vpack.c.bf16 %v515, %v515
        %v539 = vpack.c.bf16 %v518, %v518
        %v540 = vpack.c.bf16 %v520, %v520
        %v541 = vpack.c.bf16 %v523, %v523
        %v542 = vpack.c.bf16 %v525, %v525
        %543 = vst [vmem:[#allocation2] sm:$0xf] %v527
        %544 = vst [vmem:[#allocation2 + $0x4] sm:$0xf] %v528
        %545 = vst [vmem:[#allocation2 + $0x8] sm:$0xf] %v529
        %546 = vst [vmem:[#allocation2 + $0xc] sm:$0xf] %v530
        %547 = vst [vmem:[#allocation2 + $0x10] sm:$0xf] %v531
        %548 = vst [vmem:[#allocation2 + $0x14] sm:$0xf] %v532
        %549 = vst [vmem:[#allocation2 + $0x18] sm:$0xf] %v533
        %550 = vst [vmem:[#allocation2 + $0x1c] sm:$0xf] %v534
        %551 = vst [vmem:[#allocation2 + $0x20] sm:$0xf] %v535
        %552 = vst [vmem:[#allocation2 + $0x24] sm:$0xf] %v536
        %553 = vst [vmem:[#allocation2 + $0x28] sm:$0xf] %v537
        %554 = vst [vmem:[#allocation2 + $0x2c] sm:$0xf] %v538
        %555 = vst [vmem:[#allocation2 + $0x30] sm:$0xf] %v539
        %556 = vst [vmem:[#allocation2 + $0x34] sm:$0xf] %v540
        %557 = vst [vmem:[#allocation2 + $0x38] sm:$0xf] %v541
        %558 = vst [vmem:[#allocation2 + $0x3c] sm:$0xf] %v542
      $region60: #{gcn_forward.1} parent=55 // pred_fallthru
        _
      %p559 = scmp.gt.s32.totalorder %s24, 0
      %p560 = pnand %p344, %p559
      %p561 = pneg %p560
      // Predicated region
      $region61: #{gcn_forward.1} parent=55 // pred_check
        _
      $region62: #{gcn_forward.1} parent=55 // pred_check_branch
        %563 = sbr.rel (%p560) target = $region64
      $region63: #{gcn_forward.1} parent=55 // pred_region
        %v564 = vld [vmem:[#allocation3] sm:$0xf]
        %v565 = vld [vmem:[#allocation3 + $0x4] sm:$0xf]
        %v566 = vld [vmem:[#allocation3 + $0x8] sm:$0xf]
        %v567 = vld [vmem:[#allocation3 + $0xc] sm:$0xf]
        %v568 = vld [vmem:[#allocation3 + $0x10] sm:$0xf]
        %v569 = vld [vmem:[#allocation3 + $0x14] sm:$0xf]
        %v570 = vld [vmem:[#allocation3 + $0x18] sm:$0xf]
        %v571 = vld [vmem:[#allocation3 + $0x1c] sm:$0xf]
        %v572 = vld [vmem:[#allocation3 + $0x20] sm:$0xf]
        %v573 = vld [vmem:[#allocation3 + $0x24] sm:$0xf]
        %v574 = vld [vmem:[#allocation3 + $0x28] sm:$0xf]
        %v575 = vld [vmem:[#allocation3 + $0x2c] sm:$0xf]
        %v576 = vld [vmem:[#allocation3 + $0x30] sm:$0xf]
        %v577 = vld [vmem:[#allocation3 + $0x34] sm:$0xf]
        %v578 = vld [vmem:[#allocation3 + $0x38] sm:$0xf]
        %v579 = vld [vmem:[#allocation3 + $0x3c] sm:$0xf]
        %v580 = vld [vmem:[%s340] sm:$0xf]
        %v581 = vld [vmem:[%s340 + $0x4] sm:$0xf]
        %v582 = vld [vmem:[%s340 + $0x8] sm:$0xf]
        %v583 = vld [vmem:[%s340 + $0xc] sm:$0xf]
        %v584 = vld [vmem:[%s340 + $0x10] sm:$0xf]
        %v585 = vld [vmem:[%s340 + $0x14] sm:$0xf]
        %v586 = vld [vmem:[%s340 + $0x18] sm:$0xf]
        %v587 = vld [vmem:[%s340 + $0x1c] sm:$0xf]
        %v588 = vld [vmem:[%s340 + $0x20] sm:$0xf]
        %v589 = vld [vmem:[%s340 + $0x24] sm:$0xf]
        %v590 = vld [vmem:[%s340 + $0x28] sm:$0xf]
        %v591 = vld [vmem:[%s340 + $0x2c] sm:$0xf]
        %v592 = vld [vmem:[%s340 + $0x30] sm:$0xf]
        %v593 = vld [vmem:[%s340 + $0x34] sm:$0xf]
        %v594 = vld [vmem:[%s340 + $0x38] sm:$0xf]
        %v595 = vld [vmem:[%s340 + $0x3c] sm:$0xf]
        %v612 = vunpack.c.l.b16 %v564
        %v613 = vunpack.c.l.b16 %v565
        %v614 = vunpack.c.l.b16 %v566
        %v615 = vunpack.c.l.b16 %v567
        %v616 = vunpack.c.l.b16 %v568
        %v617 = vunpack.c.l.b16 %v569
        %v618 = vunpack.c.l.b16 %v570
        %v619 = vunpack.c.l.b16 %v571
        %v620 = vunpack.c.l.b16 %v572
        %v621 = vunpack.c.l.b16 %v573
        %v622 = vunpack.c.l.b16 %v574
        %v623 = vunpack.c.l.b16 %v575
        %v624 = vunpack.c.l.b16 %v576
        %v625 = vunpack.c.l.b16 %v577
        %v626 = vunpack.c.l.b16 %v578
        %v627 = vunpack.c.l.b16 %v579
        %v628 = vpack.c.b16 %v613, %v612
        %v629 = vpack.c.b16 %v615, %v614
        %v630 = vpack.c.b16 %v617, %v616
        %v631 = vpack.c.b16 %v619, %v618
        %v632 = vpack.c.b16 %v621, %v620
        %v633 = vpack.c.b16 %v623, %v622
        %v634 = vpack.c.b16 %v625, %v624
        %v635 = vpack.c.b16 %v627, %v626
        %v660 = vunpack.c.l.b16 %v580
        %v661 = vunpack.c.l.b16 %v581
        %v662 = vunpack.c.l.b16 %v582
        %v663 = vunpack.c.l.b16 %v583
        %v664 = vunpack.c.l.b16 %v584
        %v665 = vunpack.c.l.b16 %v585
        %v666 = vunpack.c.l.b16 %v586
        %v667 = vunpack.c.l.b16 %v587
        %v668 = vunpack.c.l.b16 %v588
        %v669 = vunpack.c.l.b16 %v589
        %v670 = vunpack.c.l.b16 %v590
        %v671 = vunpack.c.l.b16 %v591
        %v672 = vunpack.c.l.b16 %v592
        %v673 = vunpack.c.l.b16 %v593
        %v674 = vunpack.c.l.b16 %v594
        %v675 = vunpack.c.l.b16 %v595
        %v676 = vpack.c.b16 %v661, %v660
        %v677 = vpack.c.b16 %v663, %v662
        %v678 = vpack.c.b16 %v665, %v664
        %v679 = vpack.c.b16 %v667, %v666
        %v680 = vpack.c.b16 %v669, %v668
        %v681 = vpack.c.b16 %v671, %v670
        %v682 = vpack.c.b16 %v673, %v672
        %v683 = vpack.c.b16 %v675, %v674
        %692 = vmatpush.bf16.msra.mxu0 %v683
        %693 = vmatpush.bf16.msra.mxu0 %v682
        %694 = vmatpush.bf16.msra.mxu0 %v681
        %695 = vmatpush.bf16.msra.mxu0 %v680
        %696 = vmatpush.bf16.msra.mxu0 %v679
        %697 = vmatpush.bf16.msra.mxu0 %v678
        %698 = vmatpush.bf16.msra.mxu0 %v677
        %699 = vmatpush.bf16.msra.mxu0 %v676
        %700 = vmatmul.bf16.gmra.mxu0 %v628
        %v701 = vpop.f32.mrf.mxu0
        %v702 = vadd.f32 0.0, %v701
        %v703 = vpop.f32.mrf.mxu0
        %v704 = vadd.f32 0.0, %v703
        %705 = vmatmul.bf16.gmra.mxu0 %v629
        %v706 = vpop.f32.mrf.mxu0
        %v707 = vadd.f32 0.0, %v706
        %v708 = vpop.f32.mrf.mxu0
        %v709 = vadd.f32 0.0, %v708
        %710 = vmatmul.bf16.gmra.mxu0 %v630
        %v711 = vpop.f32.mrf.mxu0
        %v712 = vadd.f32 0.0, %v711
        %v713 = vpop.f32.mrf.mxu0
        %v714 = vadd.f32 0.0, %v713
        %715 = vmatmul.bf16.gmra.mxu0 %v631
        %v716 = vpop.f32.mrf.mxu0
        %v717 = vadd.f32 0.0, %v716
        %v718 = vpop.f32.mrf.mxu0
        %v719 = vadd.f32 0.0, %v718
        %720 = vmatmul.bf16.gmra.mxu0 %v632
        %v721 = vpop.f32.mrf.mxu0
        %v722 = vadd.f32 0.0, %v721
        %v723 = vpop.f32.mrf.mxu0
        %v724 = vadd.f32 0.0, %v723
        %725 = vmatmul.bf16.gmra.mxu0 %v633
        %v726 = vpop.f32.mrf.mxu0
        %v727 = vadd.f32 0.0, %v726
        %v728 = vpop.f32.mrf.mxu0
        %v729 = vadd.f32 0.0, %v728
        %730 = vmatmul.bf16.gmra.mxu0 %v634
        %v731 = vpop.f32.mrf.mxu0
        %v732 = vadd.f32 0.0, %v731
        %v733 = vpop.f32.mrf.mxu0
        %v734 = vadd.f32 0.0, %v733
        %735 = vmatmul.bf16.gmra.mxu0 %v635
        %v736 = vpop.f32.mrf.mxu0
        %v737 = vadd.f32 0.0, %v736
        %v738 = vpop.f32.mrf.mxu0
        %v739 = vadd.f32 0.0, %v738
        %740 = vdwg.mxu0
        %v741 = vpack.c.bf16 %v702, %v702
        %v742 = vpack.c.bf16 %v704, %v704
        %v743 = vpack.c.bf16 %v707, %v707
        %v744 = vpack.c.bf16 %v709, %v709
        %v745 = vpack.c.bf16 %v712, %v712
        %v746 = vpack.c.bf16 %v714, %v714
        %v747 = vpack.c.bf16 %v717, %v717
        %v748 = vpack.c.bf16 %v719, %v719
        %v749 = vpack.c.bf16 %v722, %v722
        %v750 = vpack.c.bf16 %v724, %v724
        %v751 = vpack.c.bf16 %v727, %v727
        %v752 = vpack.c.bf16 %v729, %v729
        %v753 = vpack.c.bf16 %v732, %v732
        %v754 = vpack.c.bf16 %v734, %v734
        %v755 = vpack.c.bf16 %v737, %v737
        %v756 = vpack.c.bf16 %v739, %v739
        %757 = vst [vmem:[#allocation2] sm:$0xf] %v741
        %758 = vst [vmem:[#allocation2 + $0x4] sm:$0xf] %v742
        %759 = vst [vmem:[#allocation2 + $0x8] sm:$0xf] %v743
        %760 = vst [vmem:[#allocation2 + $0xc] sm:$0xf] %v744
        %761 = vst [vmem:[#allocation2 + $0x10] sm:$0xf] %v745
        %762 = vst [vmem:[#allocation2 + $0x14] sm:$0xf] %v746
        %763 = vst [vmem:[#allocation2 + $0x18] sm:$0xf] %v747
        %764 = vst [vmem:[#allocation2 + $0x1c] sm:$0xf] %v748
        %765 = vst [vmem:[#allocation2 + $0x20] sm:$0xf] %v749
        %766 = vst [vmem:[#allocation2 + $0x24] sm:$0xf] %v750
        %767 = vst [vmem:[#allocation2 + $0x28] sm:$0xf] %v751
        %768 = vst [vmem:[#allocation2 + $0x2c] sm:$0xf] %v752
        %769 = vst [vmem:[#allocation2 + $0x30] sm:$0xf] %v753
        %770 = vst [vmem:[#allocation2 + $0x34] sm:$0xf] %v754
        %771 = vst [vmem:[#allocation2 + $0x38] sm:$0xf] %v755
        %772 = vst [vmem:[#allocation2 + $0x3c] sm:$0xf] %v756
      $region64: #{gcn_forward.1} parent=55 // pred_fallthru
        _
      %s773 = smul.u32 %s25, 128
      %s774 = sshra.s32 %s773, 3
      %s775 = sand.u32 %s773, 7
      %s776 = smul.addr %s774, 4
      %s777 = scalar_lea.vmem %s0, %s776
      %v778 = vld [vmem:[%s777] sm:$0xf]
      %v779 = vld [vmem:[%s777 + $0x4] sm:$0xf]
      %v780 = vld [vmem:[%s777 + $0x8] sm:$0xf]
      %v781 = vld [vmem:[%s777 + $0xc] sm:$0xf]
      %v782 = vld [vmem:[%s777 + $0x10] sm:$0xf]
      %v783 = vld [vmem:[%s777 + $0x14] sm:$0xf]
      %v784 = vld [vmem:[%s777 + $0x18] sm:$0xf]
      %v785 = vld [vmem:[%s777 + $0x1c] sm:$0xf]
      %v786 = vld [vmem:[%s777 + $0x20] sm:$0xf]
      %v787 = vld [vmem:[%s777 + $0x24] sm:$0xf]
      %v788 = vld [vmem:[%s777 + $0x28] sm:$0xf]
      %v789 = vld [vmem:[%s777 + $0x2c] sm:$0xf]
      %v790 = vld [vmem:[%s777 + $0x30] sm:$0xf]
      %v791 = vld [vmem:[%s777 + $0x34] sm:$0xf]
      %v792 = vld [vmem:[%s777 + $0x38] sm:$0xf]
      %v793 = vld [vmem:[%s777 + $0x3c] sm:$0xf]
      %v794 = vld [vmem:[#allocation2] sm:$0xf]
      %v795 = vld [vmem:[#allocation2 + $0x4] sm:$0xf]
      %v796 = vld [vmem:[#allocation2 + $0x8] sm:$0xf]
      %v797 = vld [vmem:[#allocation2 + $0xc] sm:$0xf]
      %v798 = vld [vmem:[#allocation2 + $0x10] sm:$0xf]
      %v799 = vld [vmem:[#allocation2 + $0x14] sm:$0xf]
      %v800 = vld [vmem:[#allocation2 + $0x18] sm:$0xf]
      %v801 = vld [vmem:[#allocation2 + $0x1c] sm:$0xf]
      %v802 = vld [vmem:[#allocation2 + $0x20] sm:$0xf]
      %v803 = vld [vmem:[#allocation2 + $0x24] sm:$0xf]
      %v804 = vld [vmem:[#allocation2 + $0x28] sm:$0xf]
      %v805 = vld [vmem:[#allocation2 + $0x2c] sm:$0xf]
      %v806 = vld [vmem:[#allocation2 + $0x30] sm:$0xf]
      %v807 = vld [vmem:[#allocation2 + $0x34] sm:$0xf]
      %v808 = vld [vmem:[#allocation2 + $0x38] sm:$0xf]
      %v809 = vld [vmem:[#allocation2 + $0x3c] sm:$0xf]
      %v810 = vld [vmem:[%s343] sm:$0x1]
      %v812 = vperm.slane %v810, 0
      %v830 = vunpack.c.l.b16 %v778
      %v831 = vunpack.c.l.b16 %v779
      %v832 = vunpack.c.l.b16 %v780
      %v833 = vunpack.c.l.b16 %v781
      %v834 = vunpack.c.l.b16 %v782
      %v835 = vunpack.c.l.b16 %v783
      %v836 = vunpack.c.l.b16 %v784
      %v837 = vunpack.c.l.b16 %v785
      %v838 = vunpack.c.l.b16 %v786
      %v839 = vunpack.c.l.b16 %v787
      %v840 = vunpack.c.l.b16 %v788
      %v841 = vunpack.c.l.b16 %v789
      %v842 = vunpack.c.l.b16 %v790
      %v843 = vunpack.c.l.b16 %v791
      %v844 = vunpack.c.l.b16 %v792
      %v845 = vunpack.c.l.b16 %v793
      %v846 = vpack.c.b16 %v831, %v830
      %v847 = vpack.c.b16 %v833, %v832
      %v848 = vpack.c.b16 %v835, %v834
      %v849 = vpack.c.b16 %v837, %v836
      %v850 = vpack.c.b16 %v839, %v838
      %v851 = vpack.c.b16 %v841, %v840
      %v852 = vpack.c.b16 %v843, %v842
      %v853 = vpack.c.b16 %v845, %v844
      %v878 = vunpack.c.l.b16 %v794
      %v879 = vunpack.c.l.b16 %v795
      %v880 = vunpack.c.l.b16 %v796
      %v881 = vunpack.c.l.b16 %v797
      %v882 = vunpack.c.l.b16 %v798
      %v883 = vunpack.c.l.b16 %v799
      %v884 = vunpack.c.l.b16 %v800
      %v885 = vunpack.c.l.b16 %v801
      %v886 = vunpack.c.l.b16 %v802
      %v887 = vunpack.c.l.b16 %v803
      %v888 = vunpack.c.l.b16 %v804
      %v889 = vunpack.c.l.b16 %v805
      %v890 = vunpack.c.l.b16 %v806
      %v891 = vunpack.c.l.b16 %v807
      %v892 = vunpack.c.l.b16 %v808
      %v893 = vunpack.c.l.b16 %v809
      %v894 = vpack.c.b16 %v879, %v878
      %v895 = vpack.c.b16 %v881, %v880
      %v896 = vpack.c.b16 %v883, %v882
      %v897 = vpack.c.b16 %v885, %v884
      %v898 = vpack.c.b16 %v887, %v886
      %v899 = vpack.c.b16 %v889, %v888
      %v900 = vpack.c.b16 %v891, %v890
      %v901 = vpack.c.b16 %v893, %v892
      %910 = vmatpush.bf16.msra.mxu0 %v901
      %911 = vmatpush.bf16.msra.mxu0 %v900
      %912 = vmatpush.bf16.msra.mxu0 %v899
      %913 = vmatpush.bf16.msra.mxu0 %v898
      %914 = vmatpush.bf16.msra.mxu0 %v897
      %915 = vmatpush.bf16.msra.mxu0 %v896
      %916 = vmatpush.bf16.msra.mxu0 %v895
      %917 = vmatpush.bf16.msra.mxu0 %v894
      %918 = vmatmul.bf16.gmra.mxu0 %v846
      %v919 = vpop.f32.mrf.mxu0
      %v920 = vadd.f32 %v812, %v919
      %v921 = vpop.f32.mrf.mxu0
      %v922 = vadd.f32 %v812, %v921
      %923 = vmatmul.bf16.gmra.mxu0 %v847
      %v924 = vpop.f32.mrf.mxu0
      %v925 = vadd.f32 %v812, %v924
      %v926 = vpop.f32.mrf.mxu0
      %v927 = vadd.f32 %v812, %v926
      %928 = vmatmul.bf16.gmra.mxu0 %v848
      %v929 = vpop.f32.mrf.mxu0
      %v930 = vadd.f32 %v812, %v929
      %v931 = vpop.f32.mrf.mxu0
      %v932 = vadd.f32 %v812, %v931
      %933 = vmatmul.bf16.gmra.mxu0 %v849
      %v934 = vpop.f32.mrf.mxu0
      %v935 = vadd.f32 %v812, %v934
      %v936 = vpop.f32.mrf.mxu0
      %v937 = vadd.f32 %v812, %v936
      %938 = vmatmul.bf16.gmra.mxu0 %v850
      %v939 = vpop.f32.mrf.mxu0
      %v940 = vadd.f32 %v812, %v939
      %v941 = vpop.f32.mrf.mxu0
      %v942 = vadd.f32 %v812, %v941
      %943 = vmatmul.bf16.gmra.mxu0 %v851
      %v944 = vpop.f32.mrf.mxu0
      %v945 = vadd.f32 %v812, %v944
      %v946 = vpop.f32.mrf.mxu0
      %v947 = vadd.f32 %v812, %v946
      %948 = vmatmul.bf16.gmra.mxu0 %v852
      %v949 = vpop.f32.mrf.mxu0
      %v950 = vadd.f32 %v812, %v949
      %v951 = vpop.f32.mrf.mxu0
      %v952 = vadd.f32 %v812, %v951
      %953 = vmatmul.bf16.gmra.mxu0 %v853
      %v954 = vpop.f32.mrf.mxu0
      %v955 = vadd.f32 %v812, %v954
      %v956 = vpop.f32.mrf.mxu0
      %v957 = vadd.f32 %v812, %v956
      %958 = vdwg.mxu0
      %v959 = vmax.f32 %v920, 0.0
      %v960 = vmax.f32 %v922, 0.0
      %v961 = vmax.f32 %v925, 0.0
      %v962 = vmax.f32 %v927, 0.0
      %v963 = vmax.f32 %v930, 0.0
      %v964 = vmax.f32 %v932, 0.0
      %v965 = vmax.f32 %v935, 0.0
      %v966 = vmax.f32 %v937, 0.0
      %v967 = vmax.f32 %v940, 0.0
      %v968 = vmax.f32 %v942, 0.0
      %v969 = vmax.f32 %v945, 0.0
      %v970 = vmax.f32 %v947, 0.0
      %v971 = vmax.f32 %v950, 0.0
      %v972 = vmax.f32 %v952, 0.0
      %v973 = vmax.f32 %v955, 0.0
      %v974 = vmax.f32 %v957, 0.0
      %v975 = vpack.c.bf16 %v959, %v959
      %v976 = vpack.c.bf16 %v960, %v960
      %v977 = vpack.c.bf16 %v961, %v961
      %v978 = vpack.c.bf16 %v962, %v962
      %v979 = vpack.c.bf16 %v963, %v963
      %v980 = vpack.c.bf16 %v964, %v964
      %v981 = vpack.c.bf16 %v965, %v965
      %v982 = vpack.c.bf16 %v966, %v966
      %v983 = vpack.c.bf16 %v967, %v967
      %v984 = vpack.c.bf16 %v968, %v968
      %v985 = vpack.c.bf16 %v969, %v969
      %v986 = vpack.c.bf16 %v970, %v970
      %v987 = vpack.c.bf16 %v971, %v971
      %v988 = vpack.c.bf16 %v972, %v972
      %v989 = vpack.c.bf16 %v973, %v973
      %v990 = vpack.c.bf16 %v974, %v974
      %s991 = smul.addr %s774, 4
      %s992 = scalar_lea.vmem [#allocation3], %s991
      %993 = vst [vmem:[%s992] sm:$0xf] %v975
      %994 = vst [vmem:[%s992 + $0x4] sm:$0xf] %v976
      %995 = vst [vmem:[%s992 + $0x8] sm:$0xf] %v977
      %996 = vst [vmem:[%s992 + $0xc] sm:$0xf] %v978
      %997 = vst [vmem:[%s992 + $0x10] sm:$0xf] %v979
      %998 = vst [vmem:[%s992 + $0x14] sm:$0xf] %v980
      %999 = vst [vmem:[%s992 + $0x18] sm:$0xf] %v981
      %1000 = vst [vmem:[%s992 + $0x1c] sm:$0xf] %v982
      %1001 = vst [vmem:[%s992 + $0x20] sm:$0xf] %v983
      %1002 = vst [vmem:[%s992 + $0x24] sm:$0xf] %v984
      %1003 = vst [vmem:[%s992 + $0x28] sm:$0xf] %v985
      %1004 = vst [vmem:[%s992 + $0x2c] sm:$0xf] %v986
      %1005 = vst [vmem:[%s992 + $0x30] sm:$0xf] %v987
      %1006 = vst [vmem:[%s992 + $0x34] sm:$0xf] %v988
      %1007 = vst [vmem:[%s992 + $0x38] sm:$0xf] %v989
      %1008 = vst [vmem:[%s992 + $0x3c] sm:$0xf] %v990
      %p1009 = scmp.eq.s32.totalorder %s24, 2
      %p1010 = pnand %p1009, %p344
      %p1011 = pneg %p1010
      // Predicated region
      $region65: #{gcn_forward.1} parent=55 // pred_check
        _
      $region66: #{gcn_forward.1} parent=55 // pred_check_branch
        %1013 = sbr.rel (%p1010) target = $region68
      $region67: #{gcn_forward.1} parent=55 // pred_region
        %v1014 = vld [vmem:[%s4] sm:$0xf]
        %v1015 = vld [vmem:[#allocation3] sm:$0xf]
        %v1016 = vld [vmem:[#allocation3 + $0x4] sm:$0xf]
        %v1017 = vld [vmem:[#allocation3 + $0x8] sm:$0xf]
        %v1018 = vld [vmem:[#allocation3 + $0xc] sm:$0xf]
        %v1019 = vld [vmem:[#allocation3 + $0x10] sm:$0xf]
        %v1020 = vld [vmem:[#allocation3 + $0x14] sm:$0xf]
        %v1021 = vld [vmem:[#allocation3 + $0x18] sm:$0xf]
        %v1022 = vld [vmem:[#allocation3 + $0x1c] sm:$0xf]
        %v1023 = vld [vmem:[#allocation3 + $0x20] sm:$0xf]
        %v1024 = vld [vmem:[#allocation3 + $0x24] sm:$0xf]
        %v1025 = vld [vmem:[#allocation3 + $0x28] sm:$0xf]
        %v1026 = vld [vmem:[#allocation3 + $0x2c] sm:$0xf]
        %v1027 = vld [vmem:[#allocation3 + $0x30] sm:$0xf]
        %v1028 = vld [vmem:[#allocation3 + $0x34] sm:$0xf]
        %v1029 = vld [vmem:[#allocation3 + $0x38] sm:$0xf]
        %v1030 = vld [vmem:[#allocation3 + $0x3c] sm:$0xf]
        %v1047 = vunpack.c.l.b16 %v1015
        %v1048 = vunpack.c.l.b16 %v1016
        %v1049 = vunpack.c.l.b16 %v1017
        %v1050 = vunpack.c.l.b16 %v1018
        %v1051 = vunpack.c.l.b16 %v1019
        %v1052 = vunpack.c.l.b16 %v1020
        %v1053 = vunpack.c.l.b16 %v1021
        %v1054 = vunpack.c.l.b16 %v1022
        %v1055 = vunpack.c.l.b16 %v1023
        %v1056 = vunpack.c.l.b16 %v1024
        %v1057 = vunpack.c.l.b16 %v1025
        %v1058 = vunpack.c.l.b16 %v1026
        %v1059 = vunpack.c.l.b16 %v1027
        %v1060 = vunpack.c.l.b16 %v1028
        %v1061 = vunpack.c.l.b16 %v1029
        %v1062 = vunpack.c.l.b16 %v1030
        %v1063 = vpack.c.b16 %v1048, %v1047
        %v1064 = vpack.c.b16 %v1050, %v1049
        %v1065 = vpack.c.b16 %v1052, %v1051
        %v1066 = vpack.c.b16 %v1054, %v1053
        %v1067 = vpack.c.b16 %v1056, %v1055
        %v1068 = vpack.c.b16 %v1058, %v1057
        %v1069 = vpack.c.b16 %v1060, %v1059
        %v1070 = vpack.c.b16 %v1062, %v1061
        %1079 = vmatpush.bf16.msra.mxu0 %v1070
        %1080 = vmatpush.bf16.msra.mxu0 %v1069
        %1081 = vmatpush.bf16.msra.mxu0 %v1068
        %1082 = vmatpush.bf16.msra.mxu0 %v1067
        %1083 = vmatpush.bf16.msra.mxu0 %v1066
        %1084 = vmatpush.bf16.msra.mxu0 %v1065
        %1085 = vmatpush.bf16.msra.mxu0 %v1064
        %1086 = vmatpush.bf16.msra.mxu0 %v1063
        %1087 = vmatmul.bf16.gmra.mxu0 %v1014
        %v1088 = vpop.f32.mrf.mxu0
        %v1089 = vadd.f32 0.0, %v1088
        %v1090 = vpop.f32.mrf.mxu0
        %1091 = vdwg.mxu0
        %v1092 = vpack.c.bf16 %v1089, %v1089
        %v1093 = vld [vmem:[%s5] sm:$0xf]
        %v1094 = vld [vmem:[%s5 + $0x4] sm:$0xf]
        %v1095 = vld [vmem:[%s5 + $0x8] sm:$0xf]
        %v1096 = vld [vmem:[%s5 + $0xc] sm:$0xf]
        %v1097 = vld [vmem:[%s5 + $0x10] sm:$0xf]
        %v1098 = vld [vmem:[%s5 + $0x14] sm:$0xf]
        %v1099 = vld [vmem:[%s5 + $0x18] sm:$0xf]
        %v1100 = vld [vmem:[%s5 + $0x1c] sm:$0xf]
        %v1101 = vld [vmem:[%s5 + $0x20] sm:$0xf]
        %v1102 = vld [vmem:[%s5 + $0x24] sm:$0xf]
        %v1103 = vld [vmem:[%s5 + $0x28] sm:$0xf]
        %v1104 = vld [vmem:[%s5 + $0x2c] sm:$0xf]
        %v1105 = vld [vmem:[%s5 + $0x30] sm:$0xf]
        %v1106 = vld [vmem:[%s5 + $0x34] sm:$0xf]
        %v1107 = vld [vmem:[%s5 + $0x38] sm:$0xf]
        %v1108 = vld [vmem:[%s5 + $0x3c] sm:$0xf]
        %v1109 = vld [vmem:[%s6] sm:$0x1]
        %v1111 = vperm.slane %v1109, 0
        %v1129 = vunpack.c.l.b16 %v1093
        %v1130 = vunpack.c.l.b16 %v1094
        %v1131 = vunpack.c.l.b16 %v1095
        %v1132 = vunpack.c.l.b16 %v1096
        %v1133 = vunpack.c.l.b16 %v1097
        %v1134 = vunpack.c.l.b16 %v1098
        %v1135 = vunpack.c.l.b16 %v1099
        %v1136 = vunpack.c.l.b16 %v1100
        %v1137 = vunpack.c.l.b16 %v1101
        %v1138 = vunpack.c.l.b16 %v1102
        %v1139 = vunpack.c.l.b16 %v1103
        %v1140 = vunpack.c.l.b16 %v1104
        %v1141 = vunpack.c.l.b16 %v1105
        %v1142 = vunpack.c.l.b16 %v1106
        %v1143 = vunpack.c.l.b16 %v1107
        %v1144 = vunpack.c.l.b16 %v1108
        %v1145 = vpack.c.b16 %v1130, %v1129
        %v1146 = vpack.c.b16 %v1132, %v1131
        %v1147 = vpack.c.b16 %v1134, %v1133
        %v1148 = vpack.c.b16 %v1136, %v1135
        %v1149 = vpack.c.b16 %v1138, %v1137
        %v1150 = vpack.c.b16 %v1140, %v1139
        %v1151 = vpack.c.b16 %v1142, %v1141
        %v1152 = vpack.c.b16 %v1144, %v1143
        %1161 = vmatpush.bf16.msra.mxu0 %v1152
        %1162 = vmatpush.bf16.msra.mxu0 %v1151
        %1163 = vmatpush.bf16.msra.mxu0 %v1150
        %1164 = vmatpush.bf16.msra.mxu0 %v1149
        %1165 = vmatpush.bf16.msra.mxu0 %v1148
        %1166 = vmatpush.bf16.msra.mxu0 %v1147
        %1167 = vmatpush.bf16.msra.mxu0 %v1146
        %1168 = vmatpush.bf16.msra.mxu0 %v1145
        %1169 = vmatmul.bf16.gmra.mxu0 %v1092
        %v1170 = vpop.f32.mrf.mxu0
        %v1171 = vadd.f32 %v1111, %v1170
        %v1172 = vpop.f32.mrf.mxu0
        %1173 = vdwg.mxu0
        %v1174 = vmax.f32 %v1171, 0.0
        %v1175 = vpack.c.bf16 %v1174, %v1174
        %v1176 = vld [vmem:[%s7] sm:$0xf]
        %v1177 = vld [vmem:[%s7 + $0x4] sm:$0xf]
        %v1178 = vld [vmem:[%s7 + $0x8] sm:$0xf]
        %v1179 = vld [vmem:[%s7 + $0xc] sm:$0xf]
        %v1180 = vld [vmem:[%s7 + $0x10] sm:$0xf]
        %v1181 = vld [vmem:[%s7 + $0x14] sm:$0xf]
        %v1182 = vld [vmem:[%s7 + $0x18] sm:$0xf]
        %v1183 = vld [vmem:[%s7 + $0x1c] sm:$0xf]
        %v1184 = vld [vmem:[%s7 + $0x20] sm:$0xf]
        %v1185 = vld [vmem:[%s7 + $0x24] sm:$0xf]
        %v1186 = vld [vmem:[%s7 + $0x28] sm:$0xf]
        %v1187 = vld [vmem:[%s7 + $0x2c] sm:$0xf]
        %v1188 = vld [vmem:[%s7 + $0x30] sm:$0xf]
        %v1189 = vld [vmem:[%s7 + $0x34] sm:$0xf]
        %v1190 = vld [vmem:[%s7 + $0x38] sm:$0xf]
        %v1191 = vld [vmem:[%s7 + $0x3c] sm:$0xf]
        %v1192 = vld [vmem:[%s8] sm:$0x1]
        %v1194 = vperm.slane %v1192, 0
        %v1212 = vunpack.c.l.b16 %v1176
        %v1213 = vunpack.c.l.b16 %v1177
        %v1214 = vunpack.c.l.b16 %v1178
        %v1215 = vunpack.c.l.b16 %v1179
        %v1216 = vunpack.c.l.b16 %v1180
        %v1217 = vunpack.c.l.b16 %v1181
        %v1218 = vunpack.c.l.b16 %v1182
        %v1219 = vunpack.c.l.b16 %v1183
        %v1220 = vunpack.c.l.b16 %v1184
        %v1221 = vunpack.c.l.b16 %v1185
        %v1222 = vunpack.c.l.b16 %v1186
        %v1223 = vunpack.c.l.b16 %v1187
        %v1224 = vunpack.c.l.b16 %v1188
        %v1225 = vunpack.c.l.b16 %v1189
        %v1226 = vunpack.c.l.b16 %v1190
        %v1227 = vunpack.c.l.b16 %v1191
        %v1228 = vpack.c.b16 %v1213, %v1212
        %v1229 = vpack.c.b16 %v1215, %v1214
        %v1230 = vpack.c.b16 %v1217, %v1216
        %v1231 = vpack.c.b16 %v1219, %v1218
        %v1232 = vpack.c.b16 %v1221, %v1220
        %v1233 = vpack.c.b16 %v1223, %v1222
        %v1234 = vpack.c.b16 %v1225, %v1224
        %v1235 = vpack.c.b16 %v1227, %v1226
        %1244 = vmatpush.bf16.msra.mxu0 %v1235
        %1245 = vmatpush.bf16.msra.mxu0 %v1234
        %1246 = vmatpush.bf16.msra.mxu0 %v1233
        %1247 = vmatpush.bf16.msra.mxu0 %v1232
        %1248 = vmatpush.bf16.msra.mxu0 %v1231
        %1249 = vmatpush.bf16.msra.mxu0 %v1230
        %1250 = vmatpush.bf16.msra.mxu0 %v1229
        %1251 = vmatpush.bf16.msra.mxu0 %v1228
        %1252 = vmatmul.bf16.gmra.mxu0 %v1175
        %v1253 = vpop.f32.mrf.mxu0
        %v1254 = vadd.f32 %v1194, %v1253
        %v1255 = vpop.f32.mrf.mxu0
        %1256 = vdwg.mxu0
        %1257 = vst [vmem:[%s9] sm:$0xff] %v1254
      $region68: #{gcn_forward.1} parent=55 // pred_fallthru
        _
      // Predicated region
      $region69: #{gcn_forward.1} parent=55 // pred_check
        %p1258 = pneg %p244
      $region70: #{gcn_forward.1} parent=55 // pred_check_branch
        %1260 = sbr.rel (%p1258) target = $region72
      $region71: #{gcn_forward.1} parent=55 // pred_region
        _
      $region72: #{gcn_forward.1} parent=55 // pred_fallthru
        _
      // Predicated region
      $region73: #{gcn_forward.1} parent=55 // pred_check
        %p1261 = pneg %p244
      $region74: #{gcn_forward.1} parent=55 // pred_check_branch
        %1263 = sbr.rel (%p1261) target = $region76
      $region75: #{gcn_forward.1} parent=55 // pred_region
        _
      $region76: #{gcn_forward.1} parent=55 // pred_fallthru
        _
    $region56: #{gcn_forward.1} parent=5 // pred_fallthru
      _
    %p1264 = scmp.le.s32.totalorder 2, %s15
    // Predicated region
    $region77: #{gcn_forward.1} parent=5 // pred_check
      %p1265 = pneg %p1264
    $region78: #{gcn_forward.1} parent=5 // pred_check_branch
      %1267 = sbr.rel (%p1265) target = $region80
    $region79: #{gcn_forward.1} parent=5 // pred_region
      %s1268 = ssub.s32 %s15, 2
    $region80: #{gcn_forward.1} parent=5 // pred_fallthru
      _
  $region6: #{gcn_forward.1} parent=0 // loop_footer
    %s19 = sadd.s32 1, %s15
  $region7: #{gcn_forward.1} parent=0 // loop_footer_branch
    %14 = sbr.rel target = $region3
  $region8: #{gcn_forward.1} parent=0 // loop_exit
    _

</llo_original>
